<compile_context>
chip_gen: v7x
topology: tpu7x:2x2x1
jax: 0.10.0
libtpu: 0.0.40
codegen_flags: <defaults>
</compile_context>

<pallas_src>
import jax
import jax.numpy as jnp
from jax.experimental import pallas as pl
from jax.experimental.pallas import tpu as pltpu

D_IN = 512     # input features
D_HID = 256    # hidden features
N_OUT = 10     # real logits
N_PAD = 128    # lane-dense padded logits


def _round_up(n, m):
    return ((n + m - 1) // m) * m


def _classifier_kernel(x_ref, w1_ref, b1_ref, w2_ref, b2_ref, o_ref):
    # x_ref : [TILE_B, 512] f32   w1_ref: [512, 256] bf16   b1_ref: [1, 256] f32
    # w2_ref: [256, 128]   bf16   b2_ref: [1, 128]  f32     o_ref : [TILE_B, 128] bf16
    # Cast x to bf16 in-kernel (VPU cast hides under MXU/DMA slots).
    x_bf = x_ref[...].astype(jnp.bfloat16)
    # Hidden layer on the MXU, f32 accumulation.
    h = jnp.dot(x_bf, w1_ref[...], preferred_element_type=jnp.float32)
    # f32 epilogue (bias + ReLU) on the VPU (safe on v5e: no bf16 VPU there).
    h = jnp.maximum(h + b1_ref[...], 0.0)
    # Second layer: bf16 activation into the MXU, f32 accumulation.
    y = jnp.dot(h.astype(jnp.bfloat16), w2_ref[...],
                preferred_element_type=jnp.float32)
    # Lane-dense bf16 store (halves output writeback vs f32).
    o_ref[...] = (y + b2_ref[...]).astype(o_ref.dtype)


def prepare_params(w1, b1, w2, b2):
    """One-time static weight prep (hoisted out of the per-call path)."""
    w1_bf = w1.astype(jnp.bfloat16)
    b1_2d = b1.reshape(1, D_HID).astype(jnp.float32)
    w2_pad = jnp.zeros((D_HID, N_PAD), jnp.bfloat16).at[:, :N_OUT].set(
        w2.astype(jnp.bfloat16))
    b2_pad = jnp.zeros((1, N_PAD), jnp.float32).at[0, :N_OUT].set(
        b2.astype(jnp.float32))
    return w1_bf, b1_2d, w2_pad, b2_pad


def _choose_tile_b(B, cap):
    # Aim for >=2 grid steps (v7x megacore) while capping the tile at `cap`
    # rows (VMEM-safe across v5e/v6e/v7x). Rows must be a multiple of 8
    # (sublane constraint); the ragged last block is handled by Pallas.
    tb = _round_up(max(1, pl.cdiv(B, 2)), 8)
    return max(8, min(cap, tb))


def classifier_forward(x, params, *, tile_b=2048):
    """x: [B, 512] float32, params from prepare_params -> logits [B, 10] f32."""
    w1_bf, b1_2d, w2_pad, b2_pad = params
    B = x.shape[0]
    tb = _choose_tile_b(B, tile_b)
    grid = (pl.cdiv(B, tb),)

    flops = 2 * B * (D_IN * D_HID + D_HID * N_PAD)
    bytes_accessed = (x.size * 4 + w1_bf.size * 2 + w2_pad.size * 2
                      + b1_2d.size * 4 + b2_pad.size * 4 + B * N_PAD * 2)

    out = pl.pallas_call(
        _classifier_kernel,
        out_shape=jax.ShapeDtypeStruct((B, N_PAD), jnp.bfloat16),
        grid_spec=pltpu.PrefetchScalarGridSpec(
            num_scalar_prefetch=0,
            grid=grid,
            in_specs=[
                # x tile marches over the batch; weights/biases are grid-invariant.
                pl.BlockSpec((tb, D_IN), lambda i: (i, 0)),
                pl.BlockSpec((D_IN, D_HID), lambda i: (0, 0)),
                pl.BlockSpec((1, D_HID), lambda i: (0, 0)),
                pl.BlockSpec((D_HID, N_PAD), lambda i: (0, 0)),
                pl.BlockSpec((1, N_PAD), lambda i: (0, 0)),
            ],
            out_specs=pl.BlockSpec((tb, N_PAD), lambda i: (i, 0)),
        ),
        compiler_params=pltpu.CompilerParams(
            dimension_semantics=("parallel",),
            vmem_limit_bytes=32 << 20,
        ),
        cost_estimate=pl.CostEstimate(
            flops=flops, transcendentals=0, bytes_accessed=bytes_accessed),
    )(x, w1_bf, b1_2d, w2_pad, b2_pad)

    # Drop the padded logit lanes and upcast outside the kernel.
    return out[:, :N_OUT].astype(jnp.float32)


def init_params(key):
    """Deterministic init mimicking nn.Linear default (uniform +- 1/sqrt(fan_in))."""
    k1, k2, k3, k4 = jax.random.split(key, 4)
    bound1 = 1.0 / jnp.sqrt(512.0)
    bound2 = 1.0 / jnp.sqrt(256.0)
    w1 = jax.random.uniform(k1, (D_IN, D_HID), jnp.float32, -bound1, bound1)
    b1 = jax.random.uniform(k2, (D_HID,), jnp.float32, -bound1, bound1)
    w2 = jax.random.uniform(k3, (D_HID, N_OUT), jnp.float32, -bound2, bound2)
    b2 = jax.random.uniform(k4, (N_OUT,), jnp.float32, -bound2, bound2)
    return w1, b1, w2, b2


if __name__ == "__main__":
    key = jax.random.PRNGKey(0)
    k_x, k_p = jax.random.split(key)

    B = 8
    x = jax.random.normal(k_x, (B, D_IN), jnp.float32)
    w1, b1, w2, b2 = init_params(k_p)

    params = prepare_params(w1, b1, w2, b2)     # one-time static prep
    out = classifier_forward(x, params)
    out = jax.block_until_ready(out)

    # Reference check in plain JAX (f32). Tolerance loosened because matmul
    # inputs and the stored output are bf16 (accumulation is still f32).
    ref = jnp.maximum(x @ w1 + b1, 0.0) @ w2 + b2
    assert out.shape == (B, N_OUT)
    assert jnp.allclose(out, ref, atol=5e-2, rtol=5e-2), (
        f"max abs err={jnp.max(jnp.abs(out - ref))}")

    print("KERNEL_OK")
</pallas_src>

<mosaic_0001>
module attributes {stable_mosaic.version = 11 : i64} {
  func.func @_classifier_kernel(%arg0: i32, %arg1: memref<8x512xf32, #tpu.memory_space<vmem>>, %arg2: memref<512x256xbf16, #tpu.memory_space<vmem>>, %arg3: memref<1x256xf32, #tpu.memory_space<vmem>>, %arg4: memref<256x128xbf16, #tpu.memory_space<vmem>>, %arg5: memref<1x128xf32, #tpu.memory_space<vmem>>, %arg6: memref<8x128xbf16, #tpu.memory_space<vmem>>) attributes {dimension_semantics = [#tpu.dimension_semantics<parallel>], iteration_bounds = array<i64: 1>, scalar_prefetch = 0 : i64, scratch_operands = 0 : i64, tpu.core_type = #tpu.core_type<tc>, window_params = [{transform_indices = @transform_0, window_bounds = array<i64: 8, 512>}, {pipeline_mode = #tpu.pipeline_mode<synchronous>, transform_indices = @transform_1, window_bounds = array<i64: 512, 256>}, {pipeline_mode = #tpu.pipeline_mode<synchronous>, transform_indices = @transform_2, window_bounds = array<i64: 1, 256>}, {pipeline_mode = #tpu.pipeline_mode<synchronous>, transform_indices = @transform_3, window_bounds = array<i64: 256, 128>}, {pipeline_mode = #tpu.pipeline_mode<synchronous>, transform_indices = @transform_4, window_bounds = array<i64: 1, 128>}, {transform_indices = @transform_5, window_bounds = array<i64: 8, 128>}]} {
    %c0 = arith.constant 0 : index
    %c0_0 = arith.constant 0 : index
    %0 = vector.load %arg1[%c0, %c0_0] : memref<8x512xf32, #tpu.memory_space<vmem>>, vector<8x512xf32>
    %1 = arith.truncf %0 : vector<8x512xf32> to vector<8x512xbf16>
    %c0_1 = arith.constant 0 : index
    %c0_2 = arith.constant 0 : index
    %2 = vector.load %arg2[%c0_1, %c0_2] : memref<512x256xbf16, #tpu.memory_space<vmem>>, vector<512x256xbf16>
    %cst = arith.constant dense<0.000000e+00> : vector<8x256xf32>
    %3 = tpu.matmul %1, %2, %cst {dimension_numbers = #tpu.dot_dimension_numbers<[1], [0], [0], [1], [0, 0, 1, 1], [], []>} : vector<8x512xbf16>, vector<512x256xbf16>, vector<8x256xf32> -> vector<8x256xf32>
    %c0_3 = arith.constant 0 : index
    %c0_4 = arith.constant 0 : index
    %4 = vector.load %arg3[%c0_3, %c0_4] : memref<1x256xf32, #tpu.memory_space<vmem>>, vector<1x256xf32>
    %5 = vector.broadcast %4 : vector<1x256xf32> to vector<8x256xf32>
    %6 = arith.addf %3, %5 : vector<8x256xf32>
    %cst_5 = arith.constant 0.000000e+00 : f32
    %7 = vector.broadcast %cst_5 : f32 to vector<8x256xf32>
    %8 = arith.maximumf %6, %7 : vector<8x256xf32>
    %9 = arith.truncf %8 : vector<8x256xf32> to vector<8x256xbf16>
    %c0_6 = arith.constant 0 : index
    %c0_7 = arith.constant 0 : index
    %10 = vector.load %arg4[%c0_6, %c0_7] : memref<256x128xbf16, #tpu.memory_space<vmem>>, vector<256x128xbf16>
    %cst_8 = arith.constant dense<0.000000e+00> : vector<8x128xf32>
    %11 = tpu.matmul %9, %10, %cst_8 {dimension_numbers = #tpu.dot_dimension_numbers<[1], [0], [0], [1], [0, 0, 1, 1], [], []>} : vector<8x256xbf16>, vector<256x128xbf16>, vector<8x128xf32> -> vector<8x128xf32>
    %c0_9 = arith.constant 0 : index
    %c0_10 = arith.constant 0 : index
    %12 = vector.load %arg5[%c0_9, %c0_10] : memref<1x128xf32, #tpu.memory_space<vmem>>, vector<1x128xf32>
    %13 = vector.broadcast %12 : vector<1x128xf32> to vector<8x128xf32>
    %14 = arith.addf %11, %13 : vector<8x128xf32>
    %15 = arith.truncf %14 : vector<8x128xf32> to vector<8x128xbf16>
    %c0_11 = arith.constant 0 : index
    %c0_12 = arith.constant 0 : index
    %16 = vector.load %arg6[%c0_11, %c0_12] : memref<8x128xbf16, #tpu.memory_space<vmem>>, vector<8x128xbf16>
    tpu.vector_store %arg6[%c0_11, %c0_12], %15 {strides = array<i32>} : memref<8x128xbf16, #tpu.memory_space<vmem>>, vector<8x128xbf16>,
    return
  }
  func.func @transform_0(%arg0: i32) -> (i32, i32) {
    %c0_i32 = arith.constant 0 : i32
    %c0_i32_0 = arith.constant 0 : i32
    return %arg0, %c0_i32 : i32, i32
  }
  func.func @transform_1(%arg0: i32) -> (i32, i32) {
    %c0_i32 = arith.constant 0 : i32
    %c0_i32_0 = arith.constant 0 : i32
    %c0_i32_1 = arith.constant 0 : i32
    return %c0_i32, %c0_i32_0 : i32, i32
  }
  func.func @transform_2(%arg0: i32) -> (i32, i32) {
    %c0_i32 = arith.constant 0 : i32
    %c0_i32_0 = arith.constant 0 : i32
    %c0_i32_1 = arith.constant 0 : i32
    return %c0_i32, %c0_i32_0 : i32, i32
  }
  func.func @transform_3(%arg0: i32) -> (i32, i32) {
    %c0_i32 = arith.constant 0 : i32
    %c0_i32_0 = arith.constant 0 : i32
    %c0_i32_1 = arith.constant 0 : i32
    return %c0_i32, %c0_i32_0 : i32, i32
  }
  func.func @transform_4(%arg0: i32) -> (i32, i32) {
    %c0_i32 = arith.constant 0 : i32
    %c0_i32_0 = arith.constant 0 : i32
    %c0_i32_1 = arith.constant 0 : i32
    return %c0_i32, %c0_i32_0 : i32, i32
  }
  func.func @transform_5(%arg0: i32) -> (i32, i32) {
    %c0_i32 = arith.constant 0 : i32
    %c0_i32_0 = arith.constant 0 : i32
    return %arg0, %c0_i32 : i32, i32
  }
}

</mosaic_0001>

<llo_original>
// kernel: tpu_custom_call.1
$region0: #{tpu_custom_call.1}
  #allocation0 [shape = 'u32[]', space=smem, size = 0x4, offset = 0x4, fixed_abs, tag = 'smem constant byte address 0x4 - core index']
  #allocation1 [shape = 'u32[144,128]{1,0:T(1,128)}', space=vmem, size = 0x12000, scoped, tag = 'internal scratch']
  %s0 = inlined_call_operand.hbm [shape: f32[8,512], index: 0, kind: input, shape index: {}]
  %s1 = inlined_call_operand.hbm [shape: bf16[512,256], index: 1, kind: input, shape index: {}]
  %s2 = inlined_call_operand.vmem [shape: f32[1,256], index: 2, kind: input, shape index: {}]
  %s3 = inlined_call_operand.hbm [shape: bf16[256,128], index: 3, kind: input, shape index: {}]
  %s4 = inlined_call_operand.vmem [shape: f32[1,128], index: 4, kind: input, shape index: {}]
  %s5 = inlined_call_operand.hbm [shape: bf16[8,128], index: 5, kind: output, shape index: {}]
  %s6 = sld [smem:[#allocation0]]
  $region42: #{tpu_custom_call.1} parent=0
    _
  %s8 = ssub.s32 1, %s6
  %s9 = scalar_select 0, %s8, %s6
  $region1: #{tpu_custom_call.1} parent=0
    #allocation2 [shape = 'u8[16384]{0}', space=vmem, size = 0x4000, scoped, tag = 'input window, operand 0, single buffered']
    #allocation3 [shape = 's32[1]{0}', space=sflag, size = 0x4, scoped, tag = 'scoped memory for tpu_custom_call.1']
    #allocation4 [shape = 's32[1]{0}', space=sflag, size = 0x4, scoped, tag = 'scoped memory for tpu_custom_call.1']
    #allocation5 [shape = 'u8[262144]{0}', space=vmem, size = 0x40000, scoped, tag = 'input window, operand 1, single buffered']
    #allocation6 [shape = 's32[1]{0}', space=sflag, size = 0x4, scoped, tag = 'scoped memory for tpu_custom_call.1']
    #allocation7 [shape = 'u8[65536]{0}', space=vmem, size = 0x10000, scoped, tag = 'input window, operand 3, single buffered']
    #allocation8 [shape = 'u8[2048]{0}', space=vmem, size = 0x800, scoped, tag = 'output window, operand 0, single buffered']
    %10 = vsyncpa [#allocation3], 0
    %11 = vsyncpa [#allocation6], 0
    %12 = vsyncpa [#allocation4], 0
    // Predicated region
    $region2: #{tpu_custom_call.1} parent=1 // pred_check
      _
    $region3: #{tpu_custom_call.1} parent=1 // pred_check_branch
      %14 = sbr.rel (0) target = $region5
    $region4: #{tpu_custom_call.1} parent=1 // pred_region
      %s16 = ssub.s32 512, 512
      %17 = vsyncadd [#allocation3], %s16
      %s19 = sshll.u32 [#allocation2], 4
      %s20 = int_to_ptr.vmem [resolvable:$true] %s19
      %22 = dma.hbm_to_vmem [thread:$0]  %s0, 512, %s20, [#allocation3]
    $region5: #{tpu_custom_call.1} parent=1 // pred_fallthru
      _
    // Predicated region
    $region6: #{tpu_custom_call.1} parent=1 // pred_check
      _
    $region7: #{tpu_custom_call.1} parent=1 // pred_check_branch
      %24 = sbr.rel (0) target = $region9
    $region8: #{tpu_custom_call.1} parent=1 // pred_region
      %s26 = ssub.s32 8192, 8192
      %27 = vsyncadd [#allocation6], %s26
      %s28 = sshll.u32 [#allocation5], 4
      %s29 = int_to_ptr.vmem [resolvable:$true] %s28
      %34 = dma.hbm_to_vmem [thread:$0]  %s1, 8192, %s29, [#allocation6], 128, 128, 8
    $region9: #{tpu_custom_call.1} parent=1 // pred_fallthru
      _
    // Predicated region
    $region10: #{tpu_custom_call.1} parent=1 // pred_check
      _
    $region11: #{tpu_custom_call.1} parent=1 // pred_check_branch
      %36 = sbr.rel (0) target = $region13
    $region12: #{tpu_custom_call.1} parent=1 // pred_region
      _
    $region13: #{tpu_custom_call.1} parent=1 // pred_fallthru
      _
    // Predicated region
    $region14: #{tpu_custom_call.1} parent=1 // pred_check
      _
    $region15: #{tpu_custom_call.1} parent=1 // pred_check_branch
      %38 = sbr.rel (0) target = $region17
    $region16: #{tpu_custom_call.1} parent=1 // pred_region
      %s40 = ssub.s32 2048, 2048
      %41 = vsyncadd [#allocation6], %s40
      %s42 = sshll.u32 [#allocation7], 4
      %s43 = int_to_ptr.vmem [resolvable:$true] %s42
      %48 = dma.hbm_to_vmem [thread:$0]  %s3, 2048, %s43, [#allocation6], 64, 64, 4
    $region17: #{tpu_custom_call.1} parent=1 // pred_fallthru
      _
    // Predicated region
    $region18: #{tpu_custom_call.1} parent=1 // pred_check
      _
    $region19: #{tpu_custom_call.1} parent=1 // pred_check_branch
      %50 = sbr.rel (0) target = $region21
    $region20: #{tpu_custom_call.1} parent=1 // pred_region
      _
    $region21: #{tpu_custom_call.1} parent=1 // pred_fallthru
      _
    // Predicated region
    $region22: #{tpu_custom_call.1} parent=1 // pred_check
      _
    $region23: #{tpu_custom_call.1} parent=1 // pred_check_branch
      %52 = sbr.rel (0) target = $region25
    $region24: #{tpu_custom_call.1} parent=1 // pred_region
      %53 = dma.done [#allocation3], 512
    $region25: #{tpu_custom_call.1} parent=1 // pred_fallthru
      _
    // Predicated region
    $region26: #{tpu_custom_call.1} parent=1 // pred_check
      _
    $region27: #{tpu_custom_call.1} parent=1 // pred_check_branch
      %55 = sbr.rel (0) target = $region29
    $region28: #{tpu_custom_call.1} parent=1 // pred_region
      %56 = dma.done [#allocation6], 8192
    $region29: #{tpu_custom_call.1} parent=1 // pred_fallthru
      _
    // Predicated region
    $region30: #{tpu_custom_call.1} parent=1 // pred_check
      _
    $region31: #{tpu_custom_call.1} parent=1 // pred_check_branch
      %58 = sbr.rel (0) target = $region33
    $region32: #{tpu_custom_call.1} parent=1 // pred_region
      %59 = dma.done [#allocation6], 2048
    $region33: #{tpu_custom_call.1} parent=1 // pred_fallthru
      _
    %v61 = vld [vmem:[#allocation2] sm:$0xff]
    %v62 = vld [vmem:[#allocation2 + $0x8] sm:$0xff]
    %v63 = vld [vmem:[#allocation2 + $0x10] sm:$0xff]
    %v64 = vld [vmem:[#allocation2 + $0x18] sm:$0xff]
    %v65 = vpack.c.bf16 %v61, %v61
    %v66 = vpack.c.bf16 %v62, %v62
    %v67 = vpack.c.bf16 %v63, %v63
    %v68 = vpack.c.bf16 %v64, %v64
    %v69 = vld [vmem:[#allocation5] sm:$0xff]
    %v70 = vld [vmem:[#allocation5 + $0x8] sm:$0xff]
    %v71 = vld [vmem:[#allocation5 + $0x10] sm:$0xff]
    %v72 = vld [vmem:[#allocation5 + $0x18] sm:$0xff]
    %v73 = vld [vmem:[#allocation5 + $0x20] sm:$0xff]
    %v74 = vld [vmem:[#allocation5 + $0x28] sm:$0xff]
    %v75 = vld [vmem:[#allocation5 + $0x30] sm:$0xff]
    %v76 = vld [vmem:[#allocation5 + $0x38] sm:$0xff]
    %v77 = vld [vmem:[#allocation5 + $0x40] sm:$0xff]
    %v78 = vld [vmem:[#allocation5 + $0x48] sm:$0xff]
    %v79 = vld [vmem:[#allocation5 + $0x50] sm:$0xff]
    %v80 = vld [vmem:[#allocation5 + $0x58] sm:$0xff]
    %v81 = vld [vmem:[#allocation5 + $0x60] sm:$0xff]
    %v82 = vld [vmem:[#allocation5 + $0x68] sm:$0xff]
    %v83 = vld [vmem:[#allocation5 + $0x70] sm:$0xff]
    %v84 = vld [vmem:[#allocation5 + $0x78] sm:$0xff]
    %v85 = vld [vmem:[#allocation5 + $0x80] sm:$0xff]
    %v86 = vld [vmem:[#allocation5 + $0x88] sm:$0xff]
    %v87 = vld [vmem:[#allocation5 + $0x90] sm:$0xff]
    %v88 = vld [vmem:[#allocation5 + $0x98] sm:$0xff]
    %v89 = vld [vmem:[#allocation5 + $0xa0] sm:$0xff]
    %v90 = vld [vmem:[#allocation5 + $0xa8] sm:$0xff]
    %v91 = vld [vmem:[#allocation5 + $0xb0] sm:$0xff]
    %v92 = vld [vmem:[#allocation5 + $0xb8] sm:$0xff]
    %v93 = vld [vmem:[#allocation5 + $0xc0] sm:$0xff]
    %v94 = vld [vmem:[#allocation5 + $0xc8] sm:$0xff]
    %v95 = vld [vmem:[#allocation5 + $0xd0] sm:$0xff]
    %v96 = vld [vmem:[#allocation5 + $0xd8] sm:$0xff]
    %v97 = vld [vmem:[#allocation5 + $0xe0] sm:$0xff]
    %v98 = vld [vmem:[#allocation5 + $0xe8] sm:$0xff]
    %v99 = vld [vmem:[#allocation5 + $0xf0] sm:$0xff]
    %v100 = vld [vmem:[#allocation5 + $0xf8] sm:$0xff]
    %v101 = vld [vmem:[#allocation5 + $0x100] sm:$0xff]
    %v102 = vld [vmem:[#allocation5 + $0x108] sm:$0xff]
    %v103 = vld [vmem:[#allocation5 + $0x110] sm:$0xff]
    %v104 = vld [vmem:[#allocation5 + $0x118] sm:$0xff]
    %v105 = vld [vmem:[#allocation5 + $0x120] sm:$0xff]
    %v106 = vld [vmem:[#allocation5 + $0x128] sm:$0xff]
    %v107 = vld [vmem:[#allocation5 + $0x130] sm:$0xff]
    %v108 = vld [vmem:[#allocation5 + $0x138] sm:$0xff]
    %v109 = vld [vmem:[#allocation5 + $0x140] sm:$0xff]
    %v110 = vld [vmem:[#allocation5 + $0x148] sm:$0xff]
    %v111 = vld [vmem:[#allocation5 + $0x150] sm:$0xff]
    %v112 = vld [vmem:[#allocation5 + $0x158] sm:$0xff]
    %v113 = vld [vmem:[#allocation5 + $0x160] sm:$0xff]
    %v114 = vld [vmem:[#allocation5 + $0x168] sm:$0xff]
    %v115 = vld [vmem:[#allocation5 + $0x170] sm:$0xff]
    %v116 = vld [vmem:[#allocation5 + $0x178] sm:$0xff]
    %v117 = vld [vmem:[#allocation5 + $0x180] sm:$0xff]
    %v118 = vld [vmem:[#allocation5 + $0x188] sm:$0xff]
    %v119 = vld [vmem:[#allocation5 + $0x190] sm:$0xff]
    %v120 = vld [vmem:[#allocation5 + $0x198] sm:$0xff]
    %v121 = vld [vmem:[#allocation5 + $0x1a0] sm:$0xff]
    %v122 = vld [vmem:[#allocation5 + $0x1a8] sm:$0xff]
    %v123 = vld [vmem:[#allocation5 + $0x1b0] sm:$0xff]
    %v124 = vld [vmem:[#allocation5 + $0x1b8] sm:$0xff]
    %v125 = vld [vmem:[#allocation5 + $0x1c0] sm:$0xff]
    %v126 = vld [vmem:[#allocation5 + $0x1c8] sm:$0xff]
    %v127 = vld [vmem:[#allocation5 + $0x1d0] sm:$0xff]
    %v128 = vld [vmem:[#allocation5 + $0x1d8] sm:$0xff]
    %v129 = vld [vmem:[#allocation5 + $0x1e0] sm:$0xff]
    %v130 = vld [vmem:[#allocation5 + $0x1e8] sm:$0xff]
    %v131 = vld [vmem:[#allocation5 + $0x1f0] sm:$0xff]
    %v132 = vld [vmem:[#allocation5 + $0x1f8] sm:$0xff]
    %v133 = vld [vmem:[%s2] sm:$0x3]
    %v135 = vlaneseq
    %v136 = vshrl.u32 %v135, 7
    %v137 = vsub.s32 0, %v136
    %v138 = vrot.slane %v133, %v137
    %v139 = vlaneseq
    %v140 = vshrl.u32 %v139, 7
    %v141 = vsub.s32 1, %v140
    %v142 = vrot.slane %v133, %v141
    %v209 = vunpack.c.l.b16 %v69
    %v210 = vunpack.c.h.b16 %v69
    %v211 = vunpack.c.l.b16 %v70
    %v212 = vunpack.c.h.b16 %v70
    %v213 = vunpack.c.l.b16 %v71
    %v214 = vunpack.c.h.b16 %v71
    %v215 = vunpack.c.l.b16 %v72
    %v216 = vunpack.c.h.b16 %v72
    %v217 = vunpack.c.l.b16 %v73
    %v218 = vunpack.c.h.b16 %v73
    %v219 = vunpack.c.l.b16 %v74
    %v220 = vunpack.c.h.b16 %v74
    %v221 = vunpack.c.l.b16 %v75
    %v222 = vunpack.c.h.b16 %v75
    %v223 = vunpack.c.l.b16 %v76
    %v224 = vunpack.c.h.b16 %v76
    %v225 = vunpack.c.l.b16 %v77
    %v226 = vunpack.c.h.b16 %v77
    %v227 = vunpack.c.l.b16 %v78
    %v228 = vunpack.c.h.b16 %v78
    %v229 = vunpack.c.l.b16 %v79
    %v230 = vunpack.c.h.b16 %v79
    %v231 = vunpack.c.l.b16 %v80
    %v232 = vunpack.c.h.b16 %v80
    %v233 = vunpack.c.l.b16 %v81
    %v234 = vunpack.c.h.b16 %v81
    %v235 = vunpack.c.l.b16 %v82
    %v236 = vunpack.c.h.b16 %v82
    %v237 = vunpack.c.l.b16 %v83
    %v238 = vunpack.c.h.b16 %v83
    %v239 = vunpack.c.l.b16 %v84
    %v240 = vunpack.c.h.b16 %v84
    %v241 = vunpack.c.l.b16 %v85
    %v242 = vunpack.c.h.b16 %v85
    %v243 = vunpack.c.l.b16 %v86
    %v244 = vunpack.c.h.b16 %v86
    %v245 = vunpack.c.l.b16 %v87
    %v246 = vunpack.c.h.b16 %v87
    %v247 = vunpack.c.l.b16 %v88
    %v248 = vunpack.c.h.b16 %v88
    %v249 = vunpack.c.l.b16 %v89
    %v250 = vunpack.c.h.b16 %v89
    %v251 = vunpack.c.l.b16 %v90
    %v252 = vunpack.c.h.b16 %v90
    %v253 = vunpack.c.l.b16 %v91
    %v254 = vunpack.c.h.b16 %v91
    %v255 = vunpack.c.l.b16 %v92
    %v256 = vunpack.c.h.b16 %v92
    %v257 = vunpack.c.l.b16 %v93
    %v258 = vunpack.c.h.b16 %v93
    %v259 = vunpack.c.l.b16 %v94
    %v260 = vunpack.c.h.b16 %v94
    %v261 = vunpack.c.l.b16 %v95
    %v262 = vunpack.c.h.b16 %v95
    %v263 = vunpack.c.l.b16 %v96
    %v264 = vunpack.c.h.b16 %v96
    %v265 = vunpack.c.l.b16 %v97
    %v266 = vunpack.c.h.b16 %v97
    %v267 = vunpack.c.l.b16 %v98
    %v268 = vunpack.c.h.b16 %v98
    %v269 = vunpack.c.l.b16 %v99
    %v270 = vunpack.c.h.b16 %v99
    %v271 = vunpack.c.l.b16 %v100
    %v272 = vunpack.c.h.b16 %v100
    %v273 = vunpack.c.l.b16 %v101
    %v274 = vunpack.c.h.b16 %v101
    %v275 = vunpack.c.l.b16 %v102
    %v276 = vunpack.c.h.b16 %v102
    %v277 = vunpack.c.l.b16 %v103
    %v278 = vunpack.c.h.b16 %v103
    %v279 = vunpack.c.l.b16 %v104
    %v280 = vunpack.c.h.b16 %v104
    %v281 = vunpack.c.l.b16 %v105
    %v282 = vunpack.c.h.b16 %v105
    %v283 = vunpack.c.l.b16 %v106
    %v284 = vunpack.c.h.b16 %v106
    %v285 = vunpack.c.l.b16 %v107
    %v286 = vunpack.c.h.b16 %v107
    %v287 = vunpack.c.l.b16 %v108
    %v288 = vunpack.c.h.b16 %v108
    %v289 = vunpack.c.l.b16 %v109
    %v290 = vunpack.c.h.b16 %v109
    %v291 = vunpack.c.l.b16 %v110
    %v292 = vunpack.c.h.b16 %v110
    %v293 = vunpack.c.l.b16 %v111
    %v294 = vunpack.c.h.b16 %v111
    %v295 = vunpack.c.l.b16 %v112
    %v296 = vunpack.c.h.b16 %v112
    %v297 = vunpack.c.l.b16 %v113
    %v298 = vunpack.c.h.b16 %v113
    %v299 = vunpack.c.l.b16 %v114
    %v300 = vunpack.c.h.b16 %v114
    %v301 = vunpack.c.l.b16 %v115
    %v302 = vunpack.c.h.b16 %v115
    %v303 = vunpack.c.l.b16 %v116
    %v304 = vunpack.c.h.b16 %v116
    %v305 = vunpack.c.l.b16 %v117
    %v306 = vunpack.c.h.b16 %v117
    %v307 = vunpack.c.l.b16 %v118
    %v308 = vunpack.c.h.b16 %v118
    %v309 = vunpack.c.l.b16 %v119
    %v310 = vunpack.c.h.b16 %v119
    %v311 = vunpack.c.l.b16 %v120
    %v312 = vunpack.c.h.b16 %v120
    %v313 = vunpack.c.l.b16 %v121
    %v314 = vunpack.c.h.b16 %v121
    %v315 = vunpack.c.l.b16 %v122
    %v316 = vunpack.c.h.b16 %v122
    %v317 = vunpack.c.l.b16 %v123
    %v318 = vunpack.c.h.b16 %v123
    %v319 = vunpack.c.l.b16 %v124
    %v320 = vunpack.c.h.b16 %v124
    %v321 = vunpack.c.l.b16 %v125
    %v322 = vunpack.c.h.b16 %v125
    %v323 = vunpack.c.l.b16 %v126
    %v324 = vunpack.c.h.b16 %v126
    %v325 = vunpack.c.l.b16 %v127
    %v326 = vunpack.c.h.b16 %v127
    %v327 = vunpack.c.l.b16 %v128
    %v328 = vunpack.c.h.b16 %v128
    %v329 = vunpack.c.l.b16 %v129
    %v330 = vunpack.c.h.b16 %v129
    %v331 = vunpack.c.l.b16 %v130
    %v332 = vunpack.c.h.b16 %v130
    %v333 = vunpack.c.l.b16 %v131
    %v334 = vunpack.c.h.b16 %v131
    %v335 = vunpack.c.l.b16 %v132
    %v336 = vunpack.c.h.b16 %v132
    %v337 = vpack.c.b16 %v211, %v209
    %v338 = vpack.c.b16 %v212, %v210
    %v339 = vpack.c.b16 %v215, %v213
    %v340 = vpack.c.b16 %v216, %v214
    %v341 = vpack.c.b16 %v219, %v217
    %v342 = vpack.c.b16 %v220, %v218
    %v343 = vpack.c.b16 %v223, %v221
    %v344 = vpack.c.b16 %v224, %v222
    %v345 = vpack.c.b16 %v227, %v225
    %v346 = vpack.c.b16 %v228, %v226
    %v347 = vpack.c.b16 %v231, %v229
    %v348 = vpack.c.b16 %v232, %v230
    %v349 = vpack.c.b16 %v235, %v233
    %v350 = vpack.c.b16 %v236, %v234
    %v351 = vpack.c.b16 %v239, %v237
    %v352 = vpack.c.b16 %v240, %v238
    %v353 = vpack.c.b16 %v243, %v241
    %v354 = vpack.c.b16 %v244, %v242
    %v355 = vpack.c.b16 %v247, %v245
    %v356 = vpack.c.b16 %v248, %v246
    %v357 = vpack.c.b16 %v251, %v249
    %v358 = vpack.c.b16 %v252, %v250
    %v359 = vpack.c.b16 %v255, %v253
    %v360 = vpack.c.b16 %v256, %v254
    %v361 = vpack.c.b16 %v259, %v257
    %v362 = vpack.c.b16 %v260, %v258
    %v363 = vpack.c.b16 %v263, %v261
    %v364 = vpack.c.b16 %v264, %v262
    %v365 = vpack.c.b16 %v267, %v265
    %v366 = vpack.c.b16 %v268, %v266
    %v367 = vpack.c.b16 %v271, %v269
    %v368 = vpack.c.b16 %v272, %v270
    %v369 = vpack.c.b16 %v275, %v273
    %v370 = vpack.c.b16 %v276, %v274
    %v371 = vpack.c.b16 %v279, %v277
    %v372 = vpack.c.b16 %v280, %v278
    %v373 = vpack.c.b16 %v283, %v281
    %v374 = vpack.c.b16 %v284, %v282
    %v375 = vpack.c.b16 %v287, %v285
    %v376 = vpack.c.b16 %v288, %v286
    %v377 = vpack.c.b16 %v291, %v289
    %v378 = vpack.c.b16 %v292, %v290
    %v379 = vpack.c.b16 %v295, %v293
    %v380 = vpack.c.b16 %v296, %v294
    %v381 = vpack.c.b16 %v299, %v297
    %v382 = vpack.c.b16 %v300, %v298
    %v383 = vpack.c.b16 %v303, %v301
    %v384 = vpack.c.b16 %v304, %v302
    %v385 = vpack.c.b16 %v307, %v305
    %v386 = vpack.c.b16 %v308, %v306
    %v387 = vpack.c.b16 %v311, %v309
    %v388 = vpack.c.b16 %v312, %v310
    %v389 = vpack.c.b16 %v315, %v313
    %v390 = vpack.c.b16 %v316, %v314
    %v391 = vpack.c.b16 %v319, %v317
    %v392 = vpack.c.b16 %v320, %v318
    %v393 = vpack.c.b16 %v323, %v321
    %v394 = vpack.c.b16 %v324, %v322
    %v395 = vpack.c.b16 %v327, %v325
    %v396 = vpack.c.b16 %v328, %v326
    %v397 = vpack.c.b16 %v331, %v329
    %v398 = vpack.c.b16 %v332, %v330
    %v399 = vpack.c.b16 %v335, %v333
    %v400 = vpack.c.b16 %v336, %v334
    %465 = vmatprep.subr.bf16.mxu0 %v338
    %466 = vmatpush1.bf16.msra.mxu0 %v337
    %467 = vmatprep.subr.bf16.mxu0 %v340
    %468 = vmatpush1.bf16.msra.mxu0 %v339
    %469 = vmatprep.subr.bf16.mxu0 %v342
    %470 = vmatpush1.bf16.msra.mxu0 %v341
    %471 = vmatprep.subr.bf16.mxu0 %v344
    %472 = vmatpush1.bf16.msra.mxu0 %v343
    %473 = vmatprep.subr.bf16.mxu0 %v346
    %474 = vmatpush1.bf16.msra.mxu0 %v345
    %475 = vmatprep.subr.bf16.mxu0 %v348
    %476 = vmatpush1.bf16.msra.mxu0 %v347
    %477 = vmatprep.subr.bf16.mxu0 %v350
    %478 = vmatpush1.bf16.msra.mxu0 %v349
    %479 = vmatprep.subr.bf16.mxu0 %v352
    %480 = vmatpush1.bf16.msra.mxu0 %v351
    %481 = vmatprep.subr.bf16.mxu0 %v354
    %482 = vmatpush1.bf16.msra.mxu0 %v353
    %483 = vmatprep.subr.bf16.mxu0 %v356
    %484 = vmatpush1.bf16.msra.mxu0 %v355
    %485 = vmatprep.subr.bf16.mxu0 %v358
    %486 = vmatpush1.bf16.msra.mxu0 %v357
    %487 = vmatprep.subr.bf16.mxu0 %v360
    %488 = vmatpush1.bf16.msra.mxu0 %v359
    %489 = vmatprep.subr.bf16.mxu0 %v362
    %490 = vmatpush1.bf16.msra.mxu0 %v361
    %491 = vmatprep.subr.bf16.mxu0 %v364
    %492 = vmatpush1.bf16.msra.mxu0 %v363
    %493 = vmatprep.subr.bf16.mxu0 %v366
    %494 = vmatpush1.bf16.msra.mxu0 %v365
    %495 = vmatprep.subr.bf16.mxu0 %v368
    %496 = vmatpush1.bf16.msra.mxu0 %v367
    %497 = vmatprep.mubr.bf16.mxu0 %v66
    %498 = vmatmul.mubr.bf16.gmra.mrb[0].mxu0 %v65
    %v499 = vpop.f32.mrb[0].mxu0
    %v500 = vadd.f32 %v138, %v499
    %v501 = vpop.f32.mrb[0].mxu0
    %v502 = vadd.f32 %v142, %v501
    %v503 = vpop.f32.mrb[0].mxu0
    %v504 = vpop.f32.mrb[0].mxu0
    %505 = vdwg.mxu0
    %506 = vmatprep.subr.bf16.mxu0 %v370
    %507 = vmatpush1.bf16.msra.mxu0 %v369
    %508 = vmatprep.subr.bf16.mxu0 %v372
    %509 = vmatpush1.bf16.msra.mxu0 %v371
    %510 = vmatprep.subr.bf16.mxu0 %v374
    %511 = vmatpush1.bf16.msra.mxu0 %v373
    %512 = vmatprep.subr.bf16.mxu0 %v376
    %513 = vmatpush1.bf16.msra.mxu0 %v375
    %514 = vmatprep.subr.bf16.mxu0 %v378
    %515 = vmatpush1.bf16.msra.mxu0 %v377
    %516 = vmatprep.subr.bf16.mxu0 %v380
    %517 = vmatpush1.bf16.msra.mxu0 %v379
    %518 = vmatprep.subr.bf16.mxu0 %v382
    %519 = vmatpush1.bf16.msra.mxu0 %v381
    %520 = vmatprep.subr.bf16.mxu0 %v384
    %521 = vmatpush1.bf16.msra.mxu0 %v383
    %522 = vmatprep.subr.bf16.mxu0 %v386
    %523 = vmatpush1.bf16.msra.mxu0 %v385
    %524 = vmatprep.subr.bf16.mxu0 %v388
    %525 = vmatpush1.bf16.msra.mxu0 %v387
    %526 = vmatprep.subr.bf16.mxu0 %v390
    %527 = vmatpush1.bf16.msra.mxu0 %v389
    %528 = vmatprep.subr.bf16.mxu0 %v392
    %529 = vmatpush1.bf16.msra.mxu0 %v391
    %530 = vmatprep.subr.bf16.mxu0 %v394
    %531 = vmatpush1.bf16.msra.mxu0 %v393
    %532 = vmatprep.subr.bf16.mxu0 %v396
    %533 = vmatpush1.bf16.msra.mxu0 %v395
    %534 = vmatprep.subr.bf16.mxu0 %v398
    %535 = vmatpush1.bf16.msra.mxu0 %v397
    %536 = vmatprep.subr.bf16.mxu0 %v400
    %537 = vmatpush1.bf16.msra.mxu0 %v399
    %538 = vmatprep.mubr.bf16.mxu0 %v68
    %539 = vmatmul.mubr.bf16.gmra.mrb[0].mxu0 %v67
    %v540 = vpop.f32.mrb[0].mxu0
    %v541 = vadd.f32 %v500, %v540
    %v542 = vpop.f32.mrb[0].mxu0
    %v543 = vadd.f32 %v502, %v542
    %v544 = vpop.f32.mrb[0].mxu0
    %v545 = vpop.f32.mrb[0].mxu0
    %546 = vdwg.mxu0
    %v547 = vmax.f32 %v541, 0.0
    %v548 = vmax.f32 %v543, 0.0
    %v549 = vpack.c.bf16 %v547, %v547
    %v550 = vpack.c.bf16 %v548, %v548
    %v551 = vld [vmem:[#allocation7] sm:$0xf]
    %v552 = vld [vmem:[#allocation7 + $0x4] sm:$0xf]
    %v553 = vld [vmem:[#allocation7 + $0x8] sm:$0xf]
    %v554 = vld [vmem:[#allocation7 + $0xc] sm:$0xf]
    %v555 = vld [vmem:[#allocation7 + $0x10] sm:$0xf]
    %v556 = vld [vmem:[#allocation7 + $0x14] sm:$0xf]
    %v557 = vld [vmem:[#allocation7 + $0x18] sm:$0xf]
    %v558 = vld [vmem:[#allocation7 + $0x1c] sm:$0xf]
    %v559 = vld [vmem:[#allocation7 + $0x20] sm:$0xf]
    %v560 = vld [vmem:[#allocation7 + $0x24] sm:$0xf]
    %v561 = vld [vmem:[#allocation7 + $0x28] sm:$0xf]
    %v562 = vld [vmem:[#allocation7 + $0x2c] sm:$0xf]
    %v563 = vld [vmem:[#allocation7 + $0x30] sm:$0xf]
    %v564 = vld [vmem:[#allocation7 + $0x34] sm:$0xf]
    %v565 = vld [vmem:[#allocation7 + $0x38] sm:$0xf]
    %v566 = vld [vmem:[#allocation7 + $0x3c] sm:$0xf]
    %v567 = vld [vmem:[#allocation7 + $0x40] sm:$0xf]
    %v568 = vld [vmem:[#allocation7 + $0x44] sm:$0xf]
    %v569 = vld [vmem:[#allocation7 + $0x48] sm:$0xf]
    %v570 = vld [vmem:[#allocation7 + $0x4c] sm:$0xf]
    %v571 = vld [vmem:[#allocation7 + $0x50] sm:$0xf]
    %v572 = vld [vmem:[#allocation7 + $0x54] sm:$0xf]
    %v573 = vld [vmem:[#allocation7 + $0x58] sm:$0xf]
    %v574 = vld [vmem:[#allocation7 + $0x5c] sm:$0xf]
    %v575 = vld [vmem:[#allocation7 + $0x60] sm:$0xf]
    %v576 = vld [vmem:[#allocation7 + $0x64] sm:$0xf]
    %v577 = vld [vmem:[#allocation7 + $0x68] sm:$0xf]
    %v578 = vld [vmem:[#allocation7 + $0x6c] sm:$0xf]
    %v579 = vld [vmem:[#allocation7 + $0x70] sm:$0xf]
    %v580 = vld [vmem:[#allocation7 + $0x74] sm:$0xf]
    %v581 = vld [vmem:[#allocation7 + $0x78] sm:$0xf]
    %v582 = vld [vmem:[#allocation7 + $0x7c] sm:$0xf]
    %v583 = vld [vmem:[%s4] sm:$0x1]
    %v585 = vlaneseq
    %v586 = vshrl.u32 %v585, 7
    %v587 = vsub.s32 0, %v586
    %v588 = vrot.slane %v583, %v587
    %v622 = vunpack.c.l.b16 %v551
    %v623 = vunpack.c.l.b16 %v552
    %v624 = vunpack.c.l.b16 %v553
    %v625 = vunpack.c.l.b16 %v554
    %v626 = vunpack.c.l.b16 %v555
    %v627 = vunpack.c.l.b16 %v556
    %v628 = vunpack.c.l.b16 %v557
    %v629 = vunpack.c.l.b16 %v558
    %v630 = vunpack.c.l.b16 %v559
    %v631 = vunpack.c.l.b16 %v560
    %v632 = vunpack.c.l.b16 %v561
    %v633 = vunpack.c.l.b16 %v562
    %v634 = vunpack.c.l.b16 %v563
    %v635 = vunpack.c.l.b16 %v564
    %v636 = vunpack.c.l.b16 %v565
    %v637 = vunpack.c.l.b16 %v566
    %v638 = vunpack.c.l.b16 %v567
    %v639 = vunpack.c.l.b16 %v568
    %v640 = vunpack.c.l.b16 %v569
    %v641 = vunpack.c.l.b16 %v570
    %v642 = vunpack.c.l.b16 %v571
    %v643 = vunpack.c.l.b16 %v572
    %v644 = vunpack.c.l.b16 %v573
    %v645 = vunpack.c.l.b16 %v574
    %v646 = vunpack.c.l.b16 %v575
    %v647 = vunpack.c.l.b16 %v576
    %v648 = vunpack.c.l.b16 %v577
    %v649 = vunpack.c.l.b16 %v578
    %v650 = vunpack.c.l.b16 %v579
    %v651 = vunpack.c.l.b16 %v580
    %v652 = vunpack.c.l.b16 %v581
    %v653 = vunpack.c.l.b16 %v582
    %v654 = vpack.c.b16 %v623, %v622
    %v655 = vpack.c.b16 %v625, %v624
    %v656 = vpack.c.b16 %v627, %v626
    %v657 = vpack.c.b16 %v629, %v628
    %v658 = vpack.c.b16 %v631, %v630
    %v659 = vpack.c.b16 %v633, %v632
    %v660 = vpack.c.b16 %v635, %v634
    %v661 = vpack.c.b16 %v637, %v636
    %v662 = vpack.c.b16 %v639, %v638
    %v663 = vpack.c.b16 %v641, %v640
    %v664 = vpack.c.b16 %v643, %v642
    %v665 = vpack.c.b16 %v645, %v644
    %v666 = vpack.c.b16 %v647, %v646
    %v667 = vpack.c.b16 %v649, %v648
    %v668 = vpack.c.b16 %v651, %v650
    %v669 = vpack.c.b16 %v653, %v652
    %686 = vmatprep.subr.bf16.mxu0 0
    %687 = vmatpush1.bf16.msra.mxu0 %v654
    %688 = vmatprep.subr.bf16.mxu0 0
    %689 = vmatpush1.bf16.msra.mxu0 %v655
    %690 = vmatprep.subr.bf16.mxu0 0
    %691 = vmatpush1.bf16.msra.mxu0 %v656
    %692 = vmatprep.subr.bf16.mxu0 0
    %693 = vmatpush1.bf16.msra.mxu0 %v657
    %694 = vmatprep.subr.bf16.mxu0 0
    %695 = vmatpush1.bf16.msra.mxu0 %v658
    %696 = vmatprep.subr.bf16.mxu0 0
    %697 = vmatpush1.bf16.msra.mxu0 %v659
    %698 = vmatprep.subr.bf16.mxu0 0
    %699 = vmatpush1.bf16.msra.mxu0 %v660
    %700 = vmatprep.subr.bf16.mxu0 0
    %701 = vmatpush1.bf16.msra.mxu0 %v661
    %702 = vmatprep.subr.bf16.mxu0 0
    %703 = vmatpush1.bf16.msra.mxu0 %v662
    %704 = vmatprep.subr.bf16.mxu0 0
    %705 = vmatpush1.bf16.msra.mxu0 %v663
    %706 = vmatprep.subr.bf16.mxu0 0
    %707 = vmatpush1.bf16.msra.mxu0 %v664
    %708 = vmatprep.subr.bf16.mxu0 0
    %709 = vmatpush1.bf16.msra.mxu0 %v665
    %710 = vmatprep.subr.bf16.mxu0 0
    %711 = vmatpush1.bf16.msra.mxu0 %v666
    %712 = vmatprep.subr.bf16.mxu0 0
    %713 = vmatpush1.bf16.msra.mxu0 %v667
    %714 = vmatprep.subr.bf16.mxu0 0
    %715 = vmatpush1.bf16.msra.mxu0 %v668
    %716 = vmatprep.subr.bf16.mxu0 0
    %717 = vmatpush1.bf16.msra.mxu0 %v669
    %718 = vmatprep.mubr.bf16.mxu0 %v550
    %719 = vmatmul.mubr.bf16.gmra.mrb[0].mxu0 %v549
    %v720 = vpop.f32.mrb[0].mxu0
    %v721 = vadd.f32 %v588, %v720
    %v722 = vpop.f32.mrb[0].mxu0
    %v723 = vpop.f32.mrb[0].mxu0
    %v724 = vpop.f32.mrb[0].mxu0
    %725 = vdwg.mxu0
    %v726 = vpack.c.bf16 %v721, %v721
    %727 = vst [vmem:[#allocation8] sm:$0xf] %v726
    // Predicated region
    $region34: #{tpu_custom_call.1} parent=1 // pred_check
      _
    $region35: #{tpu_custom_call.1} parent=1 // pred_check_branch
      %729 = sbr.rel (0) target = $region37
    $region36: #{tpu_custom_call.1} parent=1 // pred_region
      %s731 = ssub.s32 64, 64
      %732 = vsyncadd [#allocation4], %s731
      %s734 = sshll.u32 [#allocation8], 4
      %s735 = int_to_ptr.vmem [resolvable:$true] %s734
      %737 = dma.vmem_to_hbm [thread:$0]  %s735, 64, %s5, [#allocation4]
    $region37: #{tpu_custom_call.1} parent=1 // pred_fallthru
      _
    // Predicated region
    $region38: #{tpu_custom_call.1} parent=1 // pred_check
      _
    $region39: #{tpu_custom_call.1} parent=1 // pred_check_branch
      %739 = sbr.rel (0) target = $region41
    $region40: #{tpu_custom_call.1} parent=1 // pred_region
      %740 = dma.done [#allocation4], 64
    $region41: #{tpu_custom_call.1} parent=1 // pred_fallthru
      _
    %741 = vsyncpa [#allocation3], 1
    %742 = vsyncpa [#allocation6], 1
    %743 = vsyncpa [#allocation4], 1

</llo_original>
